<compile_context>
chip_gen: v6e
topology: v6e:2x2x1
jax: 0.10.0
libtpu: 0.0.40
codegen_flags: <defaults>
</compile_context>

<pallas_src>
import functools

import jax
import jax.numpy as jnp
from jax.experimental import pallas as pl
from jax.experimental.pallas import tpu as pltpu


def _round_up(x, m):
    return (x + m - 1) // m * m


def _critic_kernel(x_ref, w1_ref, b1_ref, w2_ref, b2_ref, w3_ref, b3_ref, o_ref,
                   *, precision=None):
    # Layer 1: Linear(n_obs -> 512) + ReLU   (f32 accumulate on the MXU)
    h1 = jnp.dot(x_ref[...], w1_ref[...],
                 preferred_element_type=jnp.float32, precision=precision)
    h1 = jnp.maximum(h1 + b1_ref[...], 0.0)

    # Layer 2: Linear(512 -> 128) + ReLU (intermediate re-cast to compute dtype
    # before hitting the MXU again; halves vst/vld pressure on v5e as well)
    h2 = jnp.dot(h1.astype(w2_ref.dtype), w2_ref[...],
                 preferred_element_type=jnp.float32, precision=precision)
    h2 = jnp.maximum(h2 + b2_ref[...], 0.0)

    # Layer 3 (torch "layer16"): Linear(128 -> n_act), no activation
    out = jnp.dot(h2.astype(w3_ref.dtype), w3_ref[...],
                  preferred_element_type=jnp.float32, precision=precision)
    o_ref[...] = (out + b3_ref[...]).astype(o_ref.dtype)


def prepare_params(params, compute_dtype=jnp.bfloat16):
    """One-time weight/bias preparation (dtype casts), reused across calls.

    Weights are cast to `compute_dtype` (fed to the MXU); biases stay f32
    (bias-add + ReLU run in f32 on the VPU).
    """
    w1, b1, w2, b2, w3, b3 = params
    cast_w = lambda w: jnp.asarray(w, compute_dtype)
    cast_b = lambda b: jnp.asarray(b, jnp.float32).reshape(1, -1)
    return (cast_w(w1), cast_b(b1), cast_w(w2), cast_b(b2), cast_w(w3), cast_b(b3))


def critic_forward(x, prepped_params, *, tile_b=1024, precision=None):
    """x: any shape whose trailing dims flatten to n_obs (like x.view(-1, n_obs)).

    prepped_params: output of prepare_params() (weights already in the compute
    dtype, biases in f32).  Accumulation, bias and ReLU are always float32.
    """
    w1, b1, w2, b2, w3, b3 = prepped_params
    compute_dtype = w1.dtype
    n_obs = w1.shape[0]
    n_act = w3.shape[1]

    x2d = x.reshape(-1, n_obs).astype(compute_dtype)
    batch = x2d.shape[0]

    # ---- batch tiling ------------------------------------------------------
    # bf16 packs 16 rows per sublane group; f32 packs 8.
    row_align = 16 if compute_dtype == jnp.bfloat16 else 8
    tb = min(_round_up(tile_b, row_align), _round_up(batch, row_align))
    b_pad = _round_up(batch, tb)
    if b_pad != batch:
        x2d = jnp.pad(x2d, ((0, b_pad - batch), (0, 0)))

    grid = (b_pad // tb,)

    # Activation / output tiles move with the grid (double-buffered); weights &
    # biases use constant block indices so they stay VMEM-resident.
    x_spec = pl.BlockSpec((tb, n_obs), lambda i: (i, 0))      # full-extent K
    o_spec = pl.BlockSpec((tb, n_act), lambda i: (i, 0))      # narrow output
    resident = lambda a: pl.BlockSpec(a.shape, lambda i: (0,) * a.ndim)

    out = pl.pallas_call(
        functools.partial(_critic_kernel, precision=precision),
        out_shape=jax.ShapeDtypeStruct((b_pad, n_act), jnp.float32),
        grid=grid,
        in_specs=[x_spec, resident(w1), resident(b1), resident(w2),
                  resident(b2), resident(w3), resident(b3)],
        out_specs=o_spec,
        compiler_params=pltpu.CompilerParams(
            dimension_semantics=("parallel",),   # shard batch tiles on v7x's 2 TCs
            vmem_limit_bytes=32 << 20,           # footprint is tiny even at tb=2048
        ),
    )(x2d, w1, b1, w2, b2, w3, b3)

    return out if b_pad == batch else out[:batch]


def init_params(key, n_obs, n_act):
    """Deterministic PyTorch-Linear-style init (uniform(-1/sqrt(fan_in), +))."""
    def linear(key, fan_in, fan_out):
        kw, kb = jax.random.split(key)
        bound = 1.0 / jnp.sqrt(jnp.float32(fan_in))
        # stored as [in, out] (transposed vs torch's [out, in])
        w = jax.random.uniform(kw, (fan_in, fan_out), jnp.float32, -bound, bound)
        b = jax.random.uniform(kb, (1, fan_out), jnp.float32, -bound, bound)
        return w, b

    k1, k2, k3 = jax.random.split(key, 3)
    w1, b1 = linear(k1, n_obs, 512)
    w2, b2 = linear(k2, 512, 128)
    w3, b3 = linear(k3, 128, n_act)
    return (w1, b1, w2, b2, w3, b3)


def _reference(x, params):
    w1, b1, w2, b2, w3, b3 = params
    n_obs = w1.shape[0]
    h = jnp.maximum(x.reshape(-1, n_obs) @ w1 + b1, 0.0)
    h = jnp.maximum(h @ w2 + b2, 0.0)
    return h @ w3 + b3


if __name__ == "__main__":
    n_obs, n_act = 32, 8
    key = jax.random.PRNGKey(0)
    kp, kx1, kx2 = jax.random.split(key, 3)
    params = init_params(kp, n_obs, n_act)

    # One-time weight preparation (hoisted out of the per-step forward).
    prepped_f32 = prepare_params(params, jnp.float32)
    prepped_bf16 = prepare_params(params, jnp.bfloat16)

    # --- small per-step batch, f32 compute (tight tolerance) ----------------
    x_small = jax.random.normal(kx1, (8, n_obs), jnp.float32)
    out_small = jax.block_until_ready(critic_forward(x_small, prepped_f32))
    ref_small = _reference(x_small, params)
    assert out_small.shape == (8, n_act)
    assert jnp.allclose(out_small, ref_small, atol=1e-5, rtol=1e-5)

    # --- ragged 3-D input exercising the grid (tile_b=128 -> 3 tiles), f32 --
    x_big = jax.random.normal(kx2, (3, 128, n_obs), jnp.float32)   # 384 rows
    out_f32 = jax.block_until_ready(
        critic_forward(x_big, prepped_f32, tile_b=128))
    ref_big = _reference(x_big, params)
    assert out_f32.shape == (384, n_act)
    assert jnp.allclose(out_f32, ref_big, atol=1e-5, rtol=1e-5)

    # --- default bf16 MXU path (single large tile) + small bf16 batch -------
    out_bf16 = jax.block_until_ready(critic_forward(x_big, prepped_bf16))
    assert jnp.allclose(out_bf16, ref_big, atol=5e-2, rtol=5e-2)

    out_bf16_small = jax.block_until_ready(critic_forward(x_small, prepped_bf16))
    assert jnp.allclose(out_bf16_small, ref_small, atol=5e-2, rtol=5e-2)

    print("KERNEL_OK")
</pallas_src>

<mosaic_0001>
module attributes {stable_mosaic.version = 11 : i64} {
  func.func @_critic_kernel(%arg0: i32, %arg1: memref<8x32xf32, #tpu.memory_space<vmem>>, %arg2: memref<32x512xf32, #tpu.memory_space<vmem>>, %arg3: memref<1x512xf32, #tpu.memory_space<vmem>>, %arg4: memref<512x128xf32, #tpu.memory_space<vmem>>, %arg5: memref<1x128xf32, #tpu.memory_space<vmem>>, %arg6: memref<128x8xf32, #tpu.memory_space<vmem>>, %arg7: memref<1x8xf32, #tpu.memory_space<vmem>>, %arg8: memref<8x8xf32, #tpu.memory_space<vmem>>) attributes {dimension_semantics = [#tpu.dimension_semantics<parallel>], iteration_bounds = array<i64: 1>, scalar_prefetch = 0 : i64, scratch_operands = 0 : i64, tpu.core_type = #tpu.core_type<tc>, window_params = [{transform_indices = @transform_0, window_bounds = array<i64: 8, 32>}, {pipeline_mode = #tpu.pipeline_mode<synchronous>, transform_indices = @transform_1, window_bounds = array<i64: 32, 512>}, {pipeline_mode = #tpu.pipeline_mode<synchronous>, transform_indices = @transform_2, window_bounds = array<i64: 1, 512>}, {pipeline_mode = #tpu.pipeline_mode<synchronous>, transform_indices = @transform_3, window_bounds = array<i64: 512, 128>}, {pipeline_mode = #tpu.pipeline_mode<synchronous>, transform_indices = @transform_4, window_bounds = array<i64: 1, 128>}, {pipeline_mode = #tpu.pipeline_mode<synchronous>, transform_indices = @transform_5, window_bounds = array<i64: 128, 8>}, {pipeline_mode = #tpu.pipeline_mode<synchronous>, transform_indices = @transform_6, window_bounds = array<i64: 1, 8>}, {transform_indices = @transform_7, window_bounds = array<i64: 8, 8>}]} {
    %c0 = arith.constant 0 : index
    %c0_0 = arith.constant 0 : index
    %0 = vector.load %arg1[%c0, %c0_0] : memref<8x32xf32, #tpu.memory_space<vmem>>, vector<8x32xf32>
    %c0_1 = arith.constant 0 : index
    %c0_2 = arith.constant 0 : index
    %1 = vector.load %arg2[%c0_1, %c0_2] : memref<32x512xf32, #tpu.memory_space<vmem>>, vector<32x512xf32>
    %cst = arith.constant dense<0.000000e+00> : vector<8x512xf32>
    %2 = tpu.matmul %0, %1, %cst {dimension_numbers = #tpu.dot_dimension_numbers<[1], [0], [0], [1], [0, 0, 1, 1], [], []>} : vector<8x32xf32>, vector<32x512xf32>, vector<8x512xf32> -> vector<8x512xf32>
    %c0_3 = arith.constant 0 : index
    %c0_4 = arith.constant 0 : index
    %3 = vector.load %arg3[%c0_3, %c0_4] : memref<1x512xf32, #tpu.memory_space<vmem>>, vector<1x512xf32>
    %4 = vector.broadcast %3 : vector<1x512xf32> to vector<8x512xf32>
    %5 = arith.addf %2, %4 : vector<8x512xf32>
    %cst_5 = arith.constant 0.000000e+00 : f32
    %6 = vector.broadcast %cst_5 : f32 to vector<8x512xf32>
    %7 = arith.maximumf %5, %6 : vector<8x512xf32>
    %c0_6 = arith.constant 0 : index
    %c0_7 = arith.constant 0 : index
    %8 = vector.load %arg4[%c0_6, %c0_7] : memref<512x128xf32, #tpu.memory_space<vmem>>, vector<512x128xf32>
    %cst_8 = arith.constant dense<0.000000e+00> : vector<8x128xf32>
    %9 = tpu.matmul %7, %8, %cst_8 {dimension_numbers = #tpu.dot_dimension_numbers<[1], [0], [0], [1], [0, 0, 1, 1], [], []>} : vector<8x512xf32>, vector<512x128xf32>, vector<8x128xf32> -> vector<8x128xf32>
    %c0_9 = arith.constant 0 : index
    %c0_10 = arith.constant 0 : index
    %10 = vector.load %arg5[%c0_9, %c0_10] : memref<1x128xf32, #tpu.memory_space<vmem>>, vector<1x128xf32>
    %11 = vector.broadcast %10 : vector<1x128xf32> to vector<8x128xf32>
    %12 = arith.addf %9, %11 : vector<8x128xf32>
    %cst_11 = arith.constant 0.000000e+00 : f32
    %13 = vector.broadcast %cst_11 : f32 to vector<8x128xf32>
    %14 = arith.maximumf %12, %13 : vector<8x128xf32>
    %c0_12 = arith.constant 0 : index
    %c0_13 = arith.constant 0 : index
    %15 = vector.load %arg6[%c0_12, %c0_13] : memref<128x8xf32, #tpu.memory_space<vmem>>, vector<128x8xf32>
    %cst_14 = arith.constant dense<0.000000e+00> : vector<8x8xf32>
    %16 = tpu.matmul %14, %15, %cst_14 {dimension_numbers = #tpu.dot_dimension_numbers<[1], [0], [0], [1], [0, 0, 1, 1], [], []>} : vector<8x128xf32>, vector<128x8xf32>, vector<8x8xf32> -> vector<8x8xf32>
    %c0_15 = arith.constant 0 : index
    %c0_16 = arith.constant 0 : index
    %17 = vector.load %arg7[%c0_15, %c0_16] : memref<1x8xf32, #tpu.memory_space<vmem>>, vector<1x8xf32>
    %18 = vector.broadcast %17 : vector<1x8xf32> to vector<8x8xf32>
    %19 = arith.addf %16, %18 : vector<8x8xf32>
    %c0_17 = arith.constant 0 : index
    %c0_18 = arith.constant 0 : index
    %20 = vector.load %arg8[%c0_17, %c0_18] : memref<8x8xf32, #tpu.memory_space<vmem>>, vector<8x8xf32>
    tpu.vector_store %arg8[%c0_17, %c0_18], %19 {strides = array<i32>} : memref<8x8xf32, #tpu.memory_space<vmem>>, vector<8x8xf32>,
    return
  }
  func.func @transform_0(%arg0: i32) -> (i32, i32) {
    %c0_i32 = arith.constant 0 : i32
    %c0_i32_0 = arith.constant 0 : i32
    return %arg0, %c0_i32 : i32, i32
  }
  func.func @transform_1(%arg0: i32) -> (i32, i32) {
    %c0_i32 = arith.constant 0 : i32
    %c0_i32_0 = arith.constant 0 : i32
    %c0_i32_1 = arith.constant 0 : i32
    return %c0_i32, %c0_i32_0 : i32, i32
  }
  func.func @transform_2(%arg0: i32) -> (i32, i32) {
    %c0_i32 = arith.constant 0 : i32
    %c0_i32_0 = arith.constant 0 : i32
    %c0_i32_1 = arith.constant 0 : i32
    return %c0_i32, %c0_i32_0 : i32, i32
  }
  func.func @transform_3(%arg0: i32) -> (i32, i32) {
    %c0_i32 = arith.constant 0 : i32
    %c0_i32_0 = arith.constant 0 : i32
    %c0_i32_1 = arith.constant 0 : i32
    return %c0_i32, %c0_i32_0 : i32, i32
  }
  func.func @transform_4(%arg0: i32) -> (i32, i32) {
    %c0_i32 = arith.constant 0 : i32
    %c0_i32_0 = arith.constant 0 : i32
    %c0_i32_1 = arith.constant 0 : i32
    return %c0_i32, %c0_i32_0 : i32, i32
  }
  func.func @transform_5(%arg0: i32) -> (i32, i32) {
    %c0_i32 = arith.constant 0 : i32
    %c0_i32_0 = arith.constant 0 : i32
    %c0_i32_1 = arith.constant 0 : i32
    return %c0_i32, %c0_i32_0 : i32, i32
  }
  func.func @transform_6(%arg0: i32) -> (i32, i32) {
    %c0_i32 = arith.constant 0 : i32
    %c0_i32_0 = arith.constant 0 : i32
    %c0_i32_1 = arith.constant 0 : i32
    return %c0_i32, %c0_i32_0 : i32, i32
  }
  func.func @transform_7(%arg0: i32) -> (i32, i32) {
    %c0_i32 = arith.constant 0 : i32
    %c0_i32_0 = arith.constant 0 : i32
    return %arg0, %c0_i32 : i32, i32
  }
}

</mosaic_0001>

<llo_original>
// kernel: tpu_custom_call.1
$region0: #{tpu_custom_call.1}
  #allocation0 [shape = 'u32[]', space=smem, size = 0x4, offset = 0x4, fixed_abs, tag = 'smem constant byte address 0x4 - core index']
  #allocation1 [shape = 'u32[144,128]{1,0:T(1,128)}', space=vmem, size = 0x12000, scoped, tag = 'internal scratch']
  %s0 = inlined_call_operand.vmem [shape: f32[8,32], index: 0, kind: input, shape index: {}]
  %s1 = inlined_call_operand.vmem [shape: f32[32,512], index: 1, kind: input, shape index: {}]
  %s2 = inlined_call_operand.hbm [shape: f32[1,512], index: 2, kind: input, shape index: {}]
  %s3 = inlined_call_operand.hbm [shape: f32[512,128], index: 3, kind: input, shape index: {}]
  %s4 = inlined_call_operand.vmem [shape: f32[1,128], index: 4, kind: input, shape index: {}]
  %s5 = inlined_call_operand.vmem [shape: f32[128,8], index: 5, kind: input, shape index: {}]
  %s6 = inlined_call_operand.vmem [shape: f32[1,8], index: 6, kind: input, shape index: {}]
  %s7 = inlined_call_operand.hbm [shape: f32[8,8], index: 7, kind: output, shape index: {}]
  %s8 = sld [smem:[#allocation0]]
  $region46: #{tpu_custom_call.1} parent=0
    _
  %s10 = ssub.s32 1, %s8
  %s11 = scalar_select 0, %s10, %s8
  $region1: #{tpu_custom_call.1} parent=0
    #allocation2 [shape = 'u8[2048]{0}', space=vmem, size = 0x800, scoped, tag = 'input window, operand 2, single buffered']
    #allocation3 [shape = 's32[1]{0}', space=sflag, size = 0x4, scoped, tag = 'scoped memory for tpu_custom_call.1']
    #allocation4 [shape = 's32[1]{0}', space=sflag, size = 0x4, scoped, tag = 'scoped memory for tpu_custom_call.1']
    #allocation5 [shape = 'u8[262144]{0}', space=vmem, size = 0x40000, scoped, tag = 'input window, operand 3, single buffered']
    #allocation6 [shape = 's32[1]{0}', space=sflag, size = 0x4, scoped, tag = 'scoped memory for tpu_custom_call.1']
    #allocation7 [shape = 'u8[4096]{0}', space=vmem, size = 0x1000, scoped, tag = 'output window, operand 0, single buffered']
    %12 = vsyncpa [#allocation3], 0
    %13 = vsyncpa [#allocation6], 0
    %14 = vsyncpa [#allocation4], 0
    // Predicated region
    $region2: #{tpu_custom_call.1} parent=1 // pred_check
      _
    $region3: #{tpu_custom_call.1} parent=1 // pred_check_branch
      %16 = sbr.rel (0) target = $region5
    $region4: #{tpu_custom_call.1} parent=1 // pred_region
      _
    $region5: #{tpu_custom_call.1} parent=1 // pred_fallthru
      _
    // Predicated region
    $region6: #{tpu_custom_call.1} parent=1 // pred_check
      _
    $region7: #{tpu_custom_call.1} parent=1 // pred_check_branch
      %18 = sbr.rel (0) target = $region9
    $region8: #{tpu_custom_call.1} parent=1 // pred_region
      _
    $region9: #{tpu_custom_call.1} parent=1 // pred_fallthru
      _
    // Predicated region
    $region10: #{tpu_custom_call.1} parent=1 // pred_check
      _
    $region11: #{tpu_custom_call.1} parent=1 // pred_check_branch
      %20 = sbr.rel (0) target = $region13
    $region12: #{tpu_custom_call.1} parent=1 // pred_region
      %s22 = ssub.s32 64, 64
      %23 = vsyncadd [#allocation3], %s22
      %s25 = sshll.u32 [#allocation2], 4
      %s26 = int_to_ptr.vmem [resolvable:$true] %s25
      %28 = dma.hbm_to_vmem [thread:$0]  %s2, 64, %s26, [#allocation3]
    $region13: #{tpu_custom_call.1} parent=1 // pred_fallthru
      _
    // Predicated region
    $region14: #{tpu_custom_call.1} parent=1 // pred_check
      _
    $region15: #{tpu_custom_call.1} parent=1 // pred_check_branch
      %30 = sbr.rel (0) target = $region17
    $region16: #{tpu_custom_call.1} parent=1 // pred_region
      %s32 = ssub.s32 8192, 8192
      %33 = vsyncadd [#allocation6], %s32
      %s34 = sshll.u32 [#allocation5], 4
      %s35 = int_to_ptr.vmem [resolvable:$true] %s34
      %40 = dma.hbm_to_vmem [thread:$0]  %s3, 8192, %s35, [#allocation6], 128, 128, 8
    $region17: #{tpu_custom_call.1} parent=1 // pred_fallthru
      _
    // Predicated region
    $region18: #{tpu_custom_call.1} parent=1 // pred_check
      _
    $region19: #{tpu_custom_call.1} parent=1 // pred_check_branch
      %42 = sbr.rel (0) target = $region21
    $region20: #{tpu_custom_call.1} parent=1 // pred_region
      _
    $region21: #{tpu_custom_call.1} parent=1 // pred_fallthru
      _
    // Predicated region
    $region22: #{tpu_custom_call.1} parent=1 // pred_check
      _
    $region23: #{tpu_custom_call.1} parent=1 // pred_check_branch
      %44 = sbr.rel (0) target = $region25
    $region24: #{tpu_custom_call.1} parent=1 // pred_region
      _
    $region25: #{tpu_custom_call.1} parent=1 // pred_fallthru
      _
    // Predicated region
    $region26: #{tpu_custom_call.1} parent=1 // pred_check
      _
    $region27: #{tpu_custom_call.1} parent=1 // pred_check_branch
      %46 = sbr.rel (0) target = $region29
    $region28: #{tpu_custom_call.1} parent=1 // pred_region
      _
    $region29: #{tpu_custom_call.1} parent=1 // pred_fallthru
      _
    // Predicated region
    $region30: #{tpu_custom_call.1} parent=1 // pred_check
      _
    $region31: #{tpu_custom_call.1} parent=1 // pred_check_branch
      %48 = sbr.rel (0) target = $region33
    $region32: #{tpu_custom_call.1} parent=1 // pred_region
      %49 = dma.done [#allocation3], 64
    $region33: #{tpu_custom_call.1} parent=1 // pred_fallthru
      _
    // Predicated region
    $region34: #{tpu_custom_call.1} parent=1 // pred_check
      _
    $region35: #{tpu_custom_call.1} parent=1 // pred_check_branch
      %51 = sbr.rel (0) target = $region37
    $region36: #{tpu_custom_call.1} parent=1 // pred_region
      %52 = dma.done [#allocation6], 8192
    $region37: #{tpu_custom_call.1} parent=1 // pred_fallthru
      _
    %v53 = vld [vmem:[%s0] sm:$0xff]
    %v54 = vld [vmem:[%s1] sm:$0xff]
    %v55 = vld [vmem:[%s1 + $0x8] sm:$0xff]
    %v56 = vld [vmem:[%s1 + $0x10] sm:$0xff]
    %v57 = vld [vmem:[%s1 + $0x18] sm:$0xff]
    %v58 = vld [vmem:[%s1 + $0x20] sm:$0xff]
    %v59 = vld [vmem:[%s1 + $0x28] sm:$0xff]
    %v60 = vld [vmem:[%s1 + $0x30] sm:$0xff]
    %v61 = vld [vmem:[%s1 + $0x38] sm:$0xff]
    %v62 = vld [vmem:[%s1 + $0x40] sm:$0xff]
    %v63 = vld [vmem:[%s1 + $0x48] sm:$0xff]
    %v64 = vld [vmem:[%s1 + $0x50] sm:$0xff]
    %v65 = vld [vmem:[%s1 + $0x58] sm:$0xff]
    %v66 = vld [vmem:[%s1 + $0x60] sm:$0xff]
    %v67 = vld [vmem:[%s1 + $0x68] sm:$0xff]
    %v68 = vld [vmem:[%s1 + $0x70] sm:$0xff]
    %v69 = vld [vmem:[%s1 + $0x78] sm:$0xff]
    %v70 = vld [vmem:[#allocation2] sm:$0xf]
    %v72 = vlaneseq
    %v73 = vshrl.u32 %v72, 7
    %v74 = vsub.s32 0, %v73
    %v75 = vrot.slane %v70, %v74
    %v76 = vlaneseq
    %v77 = vshrl.u32 %v76, 7
    %v78 = vsub.s32 1, %v77
    %v79 = vrot.slane %v70, %v78
    %v80 = vlaneseq
    %v81 = vshrl.u32 %v80, 7
    %v82 = vsub.s32 2, %v81
    %v83 = vrot.slane %v70, %v82
    %v84 = vlaneseq
    %v85 = vshrl.u32 %v84, 7
    %v86 = vsub.s32 3, %v85
    %v87 = vrot.slane %v70, %v86
    %vm92 = vcmask 261120
    %v94 = vsel %vm92, %v53, 0
    %96 = vmatprep.subr.mxu0 0.0
    %97 = vmatpush1.msra.mxu0 0.0
    %98 = vmatprep.subr.mxu0 0.0
    %99 = vmatpush1.msra.mxu0 0.0
    %100 = vmatprep.subr.mxu0 0.0
    %101 = vmatpush1.msra.mxu0 0.0
    %102 = vmatprep.subr.mxu0 0.0
    %103 = vmatpush1.msra.mxu0 0.0
    %104 = vmatprep.subr.mxu0 0.0
    %105 = vmatpush1.msra.mxu0 0.0
    %106 = vmatprep.subr.mxu0 0.0
    %107 = vmatpush1.msra.mxu0 0.0
    %108 = vmatprep.subr.mxu0 0.0
    %109 = vmatpush1.msra.mxu0 0.0
    %110 = vmatprep.subr.mxu0 0.0
    %111 = vmatpush1.msra.mxu0 0.0
    %112 = vmatprep.subr.mxu0 0.0
    %113 = vmatpush1.msra.mxu0 0.0
    %114 = vmatprep.subr.mxu0 0.0
    %115 = vmatpush1.msra.mxu0 0.0
    %116 = vmatprep.subr.mxu0 0.0
    %117 = vmatpush1.msra.mxu0 0.0
    %118 = vmatprep.subr.mxu0 0.0
    %119 = vmatpush1.msra.mxu0 0.0
    %120 = vmatprep.subr.mxu0 %v67
    %121 = vmatpush1.msra.mxu0 %v66
    %122 = vmatprep.subr.mxu0 %v63
    %123 = vmatpush1.msra.mxu0 %v62
    %124 = vmatprep.subr.mxu0 %v59
    %125 = vmatpush1.msra.mxu0 %v58
    %126 = vmatprep.subr.mxu0 %v55
    %127 = vmatpush1.msra.mxu0 %v54
    %128 = vmatprep.subr.mxu0 0.0
    %129 = vmatpush2.msra.mxu0 0.0
    %130 = vmatprep.subr.mxu0 0.0
    %131 = vmatpush2.msra.mxu0 0.0
    %132 = vmatprep.subr.mxu0 0.0
    %133 = vmatpush2.msra.mxu0 0.0
    %134 = vmatprep.subr.mxu0 0.0
    %135 = vmatpush2.msra.mxu0 0.0
    %136 = vmatprep.subr.mxu0 0.0
    %137 = vmatpush2.msra.mxu0 0.0
    %138 = vmatprep.subr.mxu0 0.0
    %139 = vmatpush2.msra.mxu0 0.0
    %140 = vmatprep.subr.mxu0 0.0
    %141 = vmatpush2.msra.mxu0 0.0
    %142 = vmatprep.subr.mxu0 0.0
    %143 = vmatpush2.msra.mxu0 0.0
    %144 = vmatprep.subr.mxu0 0.0
    %145 = vmatpush2.msra.mxu0 0.0
    %146 = vmatprep.subr.mxu0 0.0
    %147 = vmatpush2.msra.mxu0 0.0
    %148 = vmatprep.subr.mxu0 0.0
    %149 = vmatpush2.msra.mxu0 0.0
    %150 = vmatprep.subr.mxu0 0.0
    %151 = vmatpush2.msra.mxu0 0.0
    %152 = vmatprep.subr.mxu0 0.0
    %153 = vmatpush2.msra.mxu0 0.0
    %154 = vmatprep.subr.mxu0 0.0
    %155 = vmatpush2.msra.mxu0 0.0
    %156 = vmatprep.subr.mxu0 0.0
    %157 = vmatpush2.msra.mxu0 0.0
    %158 = vmatprep.subr.mxu0 0.0
    %159 = vmatpush2.msra.mxu0 0.0
    %160 = vmatprep.mubr.f32.mxu0 0.0
    %161 = vmatmul.mubr.f32.gmra.mxu0 %v94
    %v162 = vpop.f32.mrf.mxu0
    %v163 = vadd.f32 %v75, %v162
    %v164 = vpop.f32.mrf.mxu0
    %v165 = vadd.f32 %v79, %v164
    %166 = vdwg.mxu0
    %167 = vmatprep.subr.mxu0 0.0
    %168 = vmatpush1.msra.mxu0 0.0
    %169 = vmatprep.subr.mxu0 0.0
    %170 = vmatpush1.msra.mxu0 0.0
    %171 = vmatprep.subr.mxu0 0.0
    %172 = vmatpush1.msra.mxu0 0.0
    %173 = vmatprep.subr.mxu0 0.0
    %174 = vmatpush1.msra.mxu0 0.0
    %175 = vmatprep.subr.mxu0 0.0
    %176 = vmatpush1.msra.mxu0 0.0
    %177 = vmatprep.subr.mxu0 0.0
    %178 = vmatpush1.msra.mxu0 0.0
    %179 = vmatprep.subr.mxu0 0.0
    %180 = vmatpush1.msra.mxu0 0.0
    %181 = vmatprep.subr.mxu0 0.0
    %182 = vmatpush1.msra.mxu0 0.0
    %183 = vmatprep.subr.mxu0 0.0
    %184 = vmatpush1.msra.mxu0 0.0
    %185 = vmatprep.subr.mxu0 0.0
    %186 = vmatpush1.msra.mxu0 0.0
    %187 = vmatprep.subr.mxu0 0.0
    %188 = vmatpush1.msra.mxu0 0.0
    %189 = vmatprep.subr.mxu0 0.0
    %190 = vmatpush1.msra.mxu0 0.0
    %191 = vmatprep.subr.mxu0 %v69
    %192 = vmatpush1.msra.mxu0 %v68
    %193 = vmatprep.subr.mxu0 %v65
    %194 = vmatpush1.msra.mxu0 %v64
    %195 = vmatprep.subr.mxu0 %v61
    %196 = vmatpush1.msra.mxu0 %v60
    %197 = vmatprep.subr.mxu0 %v57
    %198 = vmatpush1.msra.mxu0 %v56
    %199 = vmatprep.subr.mxu0 0.0
    %200 = vmatpush2.msra.mxu0 0.0
    %201 = vmatprep.subr.mxu0 0.0
    %202 = vmatpush2.msra.mxu0 0.0
    %203 = vmatprep.subr.mxu0 0.0
    %204 = vmatpush2.msra.mxu0 0.0
    %205 = vmatprep.subr.mxu0 0.0
    %206 = vmatpush2.msra.mxu0 0.0
    %207 = vmatprep.subr.mxu0 0.0
    %208 = vmatpush2.msra.mxu0 0.0
    %209 = vmatprep.subr.mxu0 0.0
    %210 = vmatpush2.msra.mxu0 0.0
    %211 = vmatprep.subr.mxu0 0.0
    %212 = vmatpush2.msra.mxu0 0.0
    %213 = vmatprep.subr.mxu0 0.0
    %214 = vmatpush2.msra.mxu0 0.0
    %215 = vmatprep.subr.mxu0 0.0
    %216 = vmatpush2.msra.mxu0 0.0
    %217 = vmatprep.subr.mxu0 0.0
    %218 = vmatpush2.msra.mxu0 0.0
    %219 = vmatprep.subr.mxu0 0.0
    %220 = vmatpush2.msra.mxu0 0.0
    %221 = vmatprep.subr.mxu0 0.0
    %222 = vmatpush2.msra.mxu0 0.0
    %223 = vmatprep.subr.mxu0 0.0
    %224 = vmatpush2.msra.mxu0 0.0
    %225 = vmatprep.subr.mxu0 0.0
    %226 = vmatpush2.msra.mxu0 0.0
    %227 = vmatprep.subr.mxu0 0.0
    %228 = vmatpush2.msra.mxu0 0.0
    %229 = vmatprep.subr.mxu0 0.0
    %230 = vmatpush2.msra.mxu0 0.0
    %231 = vmatprep.mubr.f32.mxu0 0.0
    %232 = vmatmul.mubr.f32.gmra.mxu0 %v94
    %v233 = vpop.f32.mrf.mxu0
    %v234 = vadd.f32 %v83, %v233
    %v235 = vpop.f32.mrf.mxu0
    %v236 = vadd.f32 %v87, %v235
    %237 = vdwg.mxu0
    %v238 = vmax.f32 %v163, 0.0
    %v239 = vmax.f32 %v165, 0.0
    %v240 = vmax.f32 %v234, 0.0
    %v241 = vmax.f32 %v236, 0.0
    %v242 = vld [vmem:[#allocation5] sm:$0xff]
    %v243 = vld [vmem:[#allocation5 + $0x8] sm:$0xff]
    %v244 = vld [vmem:[#allocation5 + $0x10] sm:$0xff]
    %v245 = vld [vmem:[#allocation5 + $0x18] sm:$0xff]
    %v246 = vld [vmem:[#allocation5 + $0x20] sm:$0xff]
    %v247 = vld [vmem:[#allocation5 + $0x28] sm:$0xff]
    %v248 = vld [vmem:[#allocation5 + $0x30] sm:$0xff]
    %v249 = vld [vmem:[#allocation5 + $0x38] sm:$0xff]
    %v250 = vld [vmem:[#allocation5 + $0x40] sm:$0xff]
    %v251 = vld [vmem:[#allocation5 + $0x48] sm:$0xff]
    %v252 = vld [vmem:[#allocation5 + $0x50] sm:$0xff]
    %v253 = vld [vmem:[#allocation5 + $0x58] sm:$0xff]
    %v254 = vld [vmem:[#allocation5 + $0x60] sm:$0xff]
    %v255 = vld [vmem:[#allocation5 + $0x68] sm:$0xff]
    %v256 = vld [vmem:[#allocation5 + $0x70] sm:$0xff]
    %v257 = vld [vmem:[#allocation5 + $0x78] sm:$0xff]
    %v258 = vld [vmem:[#allocation5 + $0x80] sm:$0xff]
    %v259 = vld [vmem:[#allocation5 + $0x88] sm:$0xff]
    %v260 = vld [vmem:[#allocation5 + $0x90] sm:$0xff]
    %v261 = vld [vmem:[#allocation5 + $0x98] sm:$0xff]
    %v262 = vld [vmem:[#allocation5 + $0xa0] sm:$0xff]
    %v263 = vld [vmem:[#allocation5 + $0xa8] sm:$0xff]
    %v264 = vld [vmem:[#allocation5 + $0xb0] sm:$0xff]
    %v265 = vld [vmem:[#allocation5 + $0xb8] sm:$0xff]
    %v266 = vld [vmem:[#allocation5 + $0xc0] sm:$0xff]
    %v267 = vld [vmem:[#allocation5 + $0xc8] sm:$0xff]
    %v268 = vld [vmem:[#allocation5 + $0xd0] sm:$0xff]
    %v269 = vld [vmem:[#allocation5 + $0xd8] sm:$0xff]
    %v270 = vld [vmem:[#allocation5 + $0xe0] sm:$0xff]
    %v271 = vld [vmem:[#allocation5 + $0xe8] sm:$0xff]
    %v272 = vld [vmem:[#allocation5 + $0xf0] sm:$0xff]
    %v273 = vld [vmem:[#allocation5 + $0xf8] sm:$0xff]
    %v274 = vld [vmem:[#allocation5 + $0x100] sm:$0xff]
    %v275 = vld [vmem:[#allocation5 + $0x108] sm:$0xff]
    %v276 = vld [vmem:[#allocation5 + $0x110] sm:$0xff]
    %v277 = vld [vmem:[#allocation5 + $0x118] sm:$0xff]
    %v278 = vld [vmem:[#allocation5 + $0x120] sm:$0xff]
    %v279 = vld [vmem:[#allocation5 + $0x128] sm:$0xff]
    %v280 = vld [vmem:[#allocation5 + $0x130] sm:$0xff]
    %v281 = vld [vmem:[#allocation5 + $0x138] sm:$0xff]
    %v282 = vld [vmem:[#allocation5 + $0x140] sm:$0xff]
    %v283 = vld [vmem:[#allocation5 + $0x148] sm:$0xff]
    %v284 = vld [vmem:[#allocation5 + $0x150] sm:$0xff]
    %v285 = vld [vmem:[#allocation5 + $0x158] sm:$0xff]
    %v286 = vld [vmem:[#allocation5 + $0x160] sm:$0xff]
    %v287 = vld [vmem:[#allocation5 + $0x168] sm:$0xff]
    %v288 = vld [vmem:[#allocation5 + $0x170] sm:$0xff]
    %v289 = vld [vmem:[#allocation5 + $0x178] sm:$0xff]
    %v290 = vld [vmem:[#allocation5 + $0x180] sm:$0xff]
    %v291 = vld [vmem:[#allocation5 + $0x188] sm:$0xff]
    %v292 = vld [vmem:[#allocation5 + $0x190] sm:$0xff]
    %v293 = vld [vmem:[#allocation5 + $0x198] sm:$0xff]
    %v294 = vld [vmem:[#allocation5 + $0x1a0] sm:$0xff]
    %v295 = vld [vmem:[#allocation5 + $0x1a8] sm:$0xff]
    %v296 = vld [vmem:[#allocation5 + $0x1b0] sm:$0xff]
    %v297 = vld [vmem:[#allocation5 + $0x1b8] sm:$0xff]
    %v298 = vld [vmem:[#allocation5 + $0x1c0] sm:$0xff]
    %v299 = vld [vmem:[#allocation5 + $0x1c8] sm:$0xff]
    %v300 = vld [vmem:[#allocation5 + $0x1d0] sm:$0xff]
    %v301 = vld [vmem:[#allocation5 + $0x1d8] sm:$0xff]
    %v302 = vld [vmem:[#allocation5 + $0x1e0] sm:$0xff]
    %v303 = vld [vmem:[#allocation5 + $0x1e8] sm:$0xff]
    %v304 = vld [vmem:[#allocation5 + $0x1f0] sm:$0xff]
    %v305 = vld [vmem:[#allocation5 + $0x1f8] sm:$0xff]
    %v306 = vld [vmem:[%s4] sm:$0x1]
    %v308 = vlaneseq
    %v309 = vshrl.u32 %v308, 7
    %v310 = vsub.s32 0, %v309
    %v311 = vrot.slane %v306, %v310
    %313 = vmatprep.subr.mxu0 0.0
    %314 = vmatpush1.msra.mxu0 %v257
    %315 = vmatprep.subr.mxu0 0.0
    %316 = vmatpush1.msra.mxu0 %v256
    %317 = vmatprep.subr.mxu0 0.0
    %318 = vmatpush1.msra.mxu0 %v255
    %319 = vmatprep.subr.mxu0 0.0
    %320 = vmatpush1.msra.mxu0 %v254
    %321 = vmatprep.subr.mxu0 0.0
    %322 = vmatpush1.msra.mxu0 %v253
    %323 = vmatprep.subr.mxu0 0.0
    %324 = vmatpush1.msra.mxu0 %v252
    %325 = vmatprep.subr.mxu0 0.0
    %326 = vmatpush1.msra.mxu0 %v251
    %327 = vmatprep.subr.mxu0 0.0
    %328 = vmatpush1.msra.mxu0 %v250
    %329 = vmatprep.subr.mxu0 0.0
    %330 = vmatpush1.msra.mxu0 %v249
    %331 = vmatprep.subr.mxu0 0.0
    %332 = vmatpush1.msra.mxu0 %v248
    %333 = vmatprep.subr.mxu0 0.0
    %334 = vmatpush1.msra.mxu0 %v247
    %335 = vmatprep.subr.mxu0 0.0
    %336 = vmatpush1.msra.mxu0 %v246
    %337 = vmatprep.subr.mxu0 0.0
    %338 = vmatpush1.msra.mxu0 %v245
    %339 = vmatprep.subr.mxu0 0.0
    %340 = vmatpush1.msra.mxu0 %v244
    %341 = vmatprep.subr.mxu0 0.0
    %342 = vmatpush1.msra.mxu0 %v243
    %343 = vmatprep.subr.mxu0 0.0
    %344 = vmatpush1.msra.mxu0 %v242
    %345 = vmatprep.subr.mxu0 0.0
    %346 = vmatpush2.msra.mxu0 %v273
    %347 = vmatprep.subr.mxu0 0.0
    %348 = vmatpush2.msra.mxu0 %v272
    %349 = vmatprep.subr.mxu0 0.0
    %350 = vmatpush2.msra.mxu0 %v271
    %351 = vmatprep.subr.mxu0 0.0
    %352 = vmatpush2.msra.mxu0 %v270
    %353 = vmatprep.subr.mxu0 0.0
    %354 = vmatpush2.msra.mxu0 %v269
    %355 = vmatprep.subr.mxu0 0.0
    %356 = vmatpush2.msra.mxu0 %v268
    %357 = vmatprep.subr.mxu0 0.0
    %358 = vmatpush2.msra.mxu0 %v267
    %359 = vmatprep.subr.mxu0 0.0
    %360 = vmatpush2.msra.mxu0 %v266
    %361 = vmatprep.subr.mxu0 0.0
    %362 = vmatpush2.msra.mxu0 %v265
    %363 = vmatprep.subr.mxu0 0.0
    %364 = vmatpush2.msra.mxu0 %v264
    %365 = vmatprep.subr.mxu0 0.0
    %366 = vmatpush2.msra.mxu0 %v263
    %367 = vmatprep.subr.mxu0 0.0
    %368 = vmatpush2.msra.mxu0 %v262
    %369 = vmatprep.subr.mxu0 0.0
    %370 = vmatpush2.msra.mxu0 %v261
    %371 = vmatprep.subr.mxu0 0.0
    %372 = vmatpush2.msra.mxu0 %v260
    %373 = vmatprep.subr.mxu0 0.0
    %374 = vmatpush2.msra.mxu0 %v259
    %375 = vmatprep.subr.mxu0 0.0
    %376 = vmatpush2.msra.mxu0 %v258
    %377 = vmatprep.mubr.f32.mxu0 %v239
    %378 = vmatmul.mubr.f32.gmra.mxu0 %v238
    %v379 = vpop.f32.mrf.mxu0
    %v380 = vadd.f32 %v311, %v379
    %v381 = vpop.f32.mrf.mxu0
    %382 = vdwg.mxu0
    %383 = vmatprep.subr.mxu0 0.0
    %384 = vmatpush1.msra.mxu0 %v289
    %385 = vmatprep.subr.mxu0 0.0
    %386 = vmatpush1.msra.mxu0 %v288
    %387 = vmatprep.subr.mxu0 0.0
    %388 = vmatpush1.msra.mxu0 %v287
    %389 = vmatprep.subr.mxu0 0.0
    %390 = vmatpush1.msra.mxu0 %v286
    %391 = vmatprep.subr.mxu0 0.0
    %392 = vmatpush1.msra.mxu0 %v285
    %393 = vmatprep.subr.mxu0 0.0
    %394 = vmatpush1.msra.mxu0 %v284
    %395 = vmatprep.subr.mxu0 0.0
    %396 = vmatpush1.msra.mxu0 %v283
    %397 = vmatprep.subr.mxu0 0.0
    %398 = vmatpush1.msra.mxu0 %v282
    %399 = vmatprep.subr.mxu0 0.0
    %400 = vmatpush1.msra.mxu0 %v281
    %401 = vmatprep.subr.mxu0 0.0
    %402 = vmatpush1.msra.mxu0 %v280
    %403 = vmatprep.subr.mxu0 0.0
    %404 = vmatpush1.msra.mxu0 %v279
    %405 = vmatprep.subr.mxu0 0.0
    %406 = vmatpush1.msra.mxu0 %v278
    %407 = vmatprep.subr.mxu0 0.0
    %408 = vmatpush1.msra.mxu0 %v277
    %409 = vmatprep.subr.mxu0 0.0
    %410 = vmatpush1.msra.mxu0 %v276
    %411 = vmatprep.subr.mxu0 0.0
    %412 = vmatpush1.msra.mxu0 %v275
    %413 = vmatprep.subr.mxu0 0.0
    %414 = vmatpush1.msra.mxu0 %v274
    %415 = vmatprep.subr.mxu0 0.0
    %416 = vmatpush2.msra.mxu0 %v305
    %417 = vmatprep.subr.mxu0 0.0
    %418 = vmatpush2.msra.mxu0 %v304
    %419 = vmatprep.subr.mxu0 0.0
    %420 = vmatpush2.msra.mxu0 %v303
    %421 = vmatprep.subr.mxu0 0.0
    %422 = vmatpush2.msra.mxu0 %v302
    %423 = vmatprep.subr.mxu0 0.0
    %424 = vmatpush2.msra.mxu0 %v301
    %425 = vmatprep.subr.mxu0 0.0
    %426 = vmatpush2.msra.mxu0 %v300
    %427 = vmatprep.subr.mxu0 0.0
    %428 = vmatpush2.msra.mxu0 %v299
    %429 = vmatprep.subr.mxu0 0.0
    %430 = vmatpush2.msra.mxu0 %v298
    %431 = vmatprep.subr.mxu0 0.0
    %432 = vmatpush2.msra.mxu0 %v297
    %433 = vmatprep.subr.mxu0 0.0
    %434 = vmatpush2.msra.mxu0 %v296
    %435 = vmatprep.subr.mxu0 0.0
    %436 = vmatpush2.msra.mxu0 %v295
    %437 = vmatprep.subr.mxu0 0.0
    %438 = vmatpush2.msra.mxu0 %v294
    %439 = vmatprep.subr.mxu0 0.0
    %440 = vmatpush2.msra.mxu0 %v293
    %441 = vmatprep.subr.mxu0 0.0
    %442 = vmatpush2.msra.mxu0 %v292
    %443 = vmatprep.subr.mxu0 0.0
    %444 = vmatpush2.msra.mxu0 %v291
    %445 = vmatprep.subr.mxu0 0.0
    %446 = vmatpush2.msra.mxu0 %v290
    %447 = vmatprep.mubr.f32.mxu0 %v241
    %448 = vmatmul.mubr.f32.gmra.mxu0 %v240
    %v449 = vpop.f32.mrf.mxu0
    %v450 = vadd.f32 %v380, %v449
    %v451 = vpop.f32.mrf.mxu0
    %452 = vdwg.mxu0
    %v453 = vmax.f32 %v450, 0.0
    %v454 = vld [vmem:[%s5] sm:$0xff]
    %v455 = vld [vmem:[%s5 + $0x8] sm:$0xff]
    %v456 = vld [vmem:[%s5 + $0x10] sm:$0xff]
    %v457 = vld [vmem:[%s5 + $0x18] sm:$0xff]
    %v458 = vld [vmem:[%s5 + $0x20] sm:$0xff]
    %v459 = vld [vmem:[%s5 + $0x28] sm:$0xff]
    %v460 = vld [vmem:[%s5 + $0x30] sm:$0xff]
    %v461 = vld [vmem:[%s5 + $0x38] sm:$0xff]
    %v462 = vld [vmem:[%s5 + $0x40] sm:$0xff]
    %v463 = vld [vmem:[%s5 + $0x48] sm:$0xff]
    %v464 = vld [vmem:[%s5 + $0x50] sm:$0xff]
    %v465 = vld [vmem:[%s5 + $0x58] sm:$0xff]
    %v466 = vld [vmem:[%s5 + $0x60] sm:$0xff]
    %v467 = vld [vmem:[%s5 + $0x68] sm:$0xff]
    %v468 = vld [vmem:[%s5 + $0x70] sm:$0xff]
    %v469 = vld [vmem:[%s5 + $0x78] sm:$0xff]
    %v470 = vld [vmem:[%s6] sm:$0x1]
    %v472 = vlaneseq
    %v473 = vshrl.u32 %v472, 7
    %v474 = vsub.s32 0, %v473
    %v475 = vrot.slane %v470, %v474
    %477 = vmatprep.subr.mxu0 0.0
    %478 = vmatpush1.msra.mxu0 %v469
    %479 = vmatprep.subr.mxu0 0.0
    %480 = vmatpush1.msra.mxu0 %v468
    %481 = vmatprep.subr.mxu0 0.0
    %482 = vmatpush1.msra.mxu0 %v467
    %483 = vmatprep.subr.mxu0 0.0
    %484 = vmatpush1.msra.mxu0 %v466
    %485 = vmatprep.subr.mxu0 0.0
    %486 = vmatpush1.msra.mxu0 %v465
    %487 = vmatprep.subr.mxu0 0.0
    %488 = vmatpush1.msra.mxu0 %v464
    %489 = vmatprep.subr.mxu0 0.0
    %490 = vmatpush1.msra.mxu0 %v463
    %491 = vmatprep.subr.mxu0 0.0
    %492 = vmatpush1.msra.mxu0 %v462
    %493 = vmatprep.subr.mxu0 0.0
    %494 = vmatpush1.msra.mxu0 %v461
    %495 = vmatprep.subr.mxu0 0.0
    %496 = vmatpush1.msra.mxu0 %v460
    %497 = vmatprep.subr.mxu0 0.0
    %498 = vmatpush1.msra.mxu0 %v459
    %499 = vmatprep.subr.mxu0 0.0
    %500 = vmatpush1.msra.mxu0 %v458
    %501 = vmatprep.subr.mxu0 0.0
    %502 = vmatpush1.msra.mxu0 %v457
    %503 = vmatprep.subr.mxu0 0.0
    %504 = vmatpush1.msra.mxu0 %v456
    %505 = vmatprep.subr.mxu0 0.0
    %506 = vmatpush1.msra.mxu0 %v455
    %507 = vmatprep.subr.mxu0 0.0
    %508 = vmatpush1.msra.mxu0 %v454
    %509 = vmatprep.subr.mxu0 0.0
    %510 = vmatpush2.msra.mxu0 0.0
    %511 = vmatprep.subr.mxu0 0.0
    %512 = vmatpush2.msra.mxu0 0.0
    %513 = vmatprep.subr.mxu0 0.0
    %514 = vmatpush2.msra.mxu0 0.0
    %515 = vmatprep.subr.mxu0 0.0
    %516 = vmatpush2.msra.mxu0 0.0
    %517 = vmatprep.subr.mxu0 0.0
    %518 = vmatpush2.msra.mxu0 0.0
    %519 = vmatprep.subr.mxu0 0.0
    %520 = vmatpush2.msra.mxu0 0.0
    %521 = vmatprep.subr.mxu0 0.0
    %522 = vmatpush2.msra.mxu0 0.0
    %523 = vmatprep.subr.mxu0 0.0
    %524 = vmatpush2.msra.mxu0 0.0
    %525 = vmatprep.subr.mxu0 0.0
    %526 = vmatpush2.msra.mxu0 0.0
    %527 = vmatprep.subr.mxu0 0.0
    %528 = vmatpush2.msra.mxu0 0.0
    %529 = vmatprep.subr.mxu0 0.0
    %530 = vmatpush2.msra.mxu0 0.0
    %531 = vmatprep.subr.mxu0 0.0
    %532 = vmatpush2.msra.mxu0 0.0
    %533 = vmatprep.subr.mxu0 0.0
    %534 = vmatpush2.msra.mxu0 0.0
    %535 = vmatprep.subr.mxu0 0.0
    %536 = vmatpush2.msra.mxu0 0.0
    %537 = vmatprep.subr.mxu0 0.0
    %538 = vmatpush2.msra.mxu0 0.0
    %539 = vmatprep.subr.mxu0 0.0
    %540 = vmatpush2.msra.mxu0 0.0
    %541 = vmatprep.mubr.f32.mxu0 0.0
    %542 = vmatmul.mubr.f32.gmra.mxu0 %v453
    %v543 = vpop.f32.mrf.mxu0
    %v544 = vadd.f32 %v475, %v543
    %v545 = vpop.f32.mrf.mxu0
    %546 = vdwg.mxu0
    %vm547 = vcmask 64512
    %548 = vst.msk [vmem:[#allocation7] sm:$0xff] %vm547, %v544
    // Predicated region
    $region38: #{tpu_custom_call.1} parent=1 // pred_check
      _
    $region39: #{tpu_custom_call.1} parent=1 // pred_check_branch
      %550 = sbr.rel (0) target = $region41
    $region40: #{tpu_custom_call.1} parent=1 // pred_region
      %s552 = ssub.s32 128, 128
      %553 = vsyncadd [#allocation4], %s552
      %s555 = sshll.u32 [#allocation7], 4
      %s556 = int_to_ptr.vmem [resolvable:$true] %s555
      %558 = dma.vmem_to_hbm [thread:$0]  %s556, 128, %s7, [#allocation4]
    $region41: #{tpu_custom_call.1} parent=1 // pred_fallthru
      _
    // Predicated region
    $region42: #{tpu_custom_call.1} parent=1 // pred_check
      _
    $region43: #{tpu_custom_call.1} parent=1 // pred_check_branch
      %560 = sbr.rel (0) target = $region45
    $region44: #{tpu_custom_call.1} parent=1 // pred_region
      %561 = dma.done [#allocation4], 128
    $region45: #{tpu_custom_call.1} parent=1 // pred_fallthru
      _
    %562 = vsyncpa [#allocation3], 1
    %563 = vsyncpa [#allocation6], 1
    %564 = vsyncpa [#allocation4], 1

</llo_original>
